<compile_context>
chip_gen: v6e
topology: v6e:2x2x1
jax: 0.10.0
libtpu: 0.0.40
codegen_flags: <defaults>
</compile_context>

<pallas_src>
import functools

import jax
import jax.numpy as jnp
from jax.experimental import pallas as pl
from jax.experimental.pallas import tpu as pltpu

LANE = 128  # TPU lane width


def _round_up(x, m):
    return ((x + m - 1) // m) * m


def _pick_tile(n_p, t_max):
    """Largest multiple of 128 that is <= t_max and divides n_p (n_p % 128 == 0)."""
    t = min(t_max, n_p)
    t -= t % LANE
    t = max(t, LANE)
    while n_p % t:
        t -= LANE
    return t


def _vmem_caps():
    """(residency budget, hard cap) derived from this chip's VMEM capacity."""
    try:
        cap = int(pltpu.get_tpu_info().vmem_capacity_bytes)
    except Exception:
        cap = 64 * 1024 * 1024  # conservative: v7x per-TensorCore VMEM
    return (6 * cap) // 10, cap


def gcn_layer_kernel(a_ref, x_ref, w_ref, b_ref, o_ref, acc_ref, *,
                     apply_relu, x_resident, tk):
    """One GraphConv layer tile: out_i = [relu]((sum_k A[i,k] @ X[k]) @ W + b)."""
    k = pl.program_id(1)

    @pl.when(k == 0)
    def _():
        acc_ref[...] = jnp.zeros_like(acc_ref)

    if x_resident:
        # X is fully VMEM-resident; take this k-step's tk-row slab.
        x_blk = x_ref[pl.ds(pl.multiple_of(k * tk, LANE), tk), :]
    else:
        x_blk = x_ref[...]

    # Aggregation A @ X: bf16 operands on the MXU, f32 accumulation.
    acc_ref[...] += jnp.dot(a_ref[...], x_blk,
                            preferred_element_type=jnp.float32)

    @pl.when(k == pl.num_programs(1) - 1)
    def _():
        # Projection (A @ X) @ W: bf16 operands, f32 accumulation.
        h = jnp.dot(acc_ref[...].astype(w_ref.dtype), w_ref[...],
                    preferred_element_type=jnp.float32)
        h = h + b_ref[...]            # bias + ReLU in f32 (VPU fast path on v5e)
        if apply_relu:
            h = jnp.maximum(h, 0.0)
        o_ref[...] = h.astype(o_ref.dtype)


def gcn_layer(a_bf16, x_bf16, w_bf16, b_f32, *, apply_relu, out_dtype,
              tm_max=1024, tk_max=2048):
    n_p = a_bf16.shape[0]
    f_p = x_bf16.shape[1]
    h_p = w_bf16.shape[1]
    assert n_p % LANE == 0 and f_p % LANE == 0 and h_p % LANE == 0

    # Tile selection: as large as the (128-aligned) graph allows, capped by
    # tm_max/tk_max. Clamping to divisors of n_p keeps padding at the 128-
    # alignment minimum (no tile-sized blow-up for small/medium graphs).
    tm = _pick_tile(n_p, tm_max)
    tk = _pick_tile(n_p, tk_max)
    # Keep >=2 row steps when possible so the "parallel" axis feeds both
    # TensorCores on v7x (no-op on single-TC v5e/v6e).
    while n_p // tm < 2 and tm > LANE:
        tm = _pick_tile(n_p, max(LANE, tm // 2))

    out_itemsize = jnp.dtype(out_dtype).itemsize

    def footprint(resident):
        a_b = 2 * tm * tk * 2                               # A tiles (bf16, 2 bufs)
        x_b = (2 * n_p * f_p * 2) if resident else (2 * tk * f_p * 2)
        o_b = 2 * tm * h_p * out_itemsize                   # out tiles (2 bufs)
        acc_b = tm * f_p * 4                                 # f32 accumulator
        w_b = 2 * (f_p * h_p * 2 + h_p * 4)                  # W + bias (resident)
        return a_b + x_b + o_b + acc_b + w_b

    budget, cap = _vmem_caps()
    # X residency stops re-streaming X from HBM once per row tile.
    x_resident = footprint(True) <= budget
    fp = footprint(x_resident)
    vmem_limit = min(int(cap * 0.9), fp + 8 * 1024 * 1024)

    if x_resident:
        x_spec = pl.BlockSpec((n_p, f_p), lambda i, k: (0, 0))   # loaded once
    else:
        x_spec = pl.BlockSpec((tk, f_p), lambda i, k: (k, 0))    # streamed

    kernel = functools.partial(gcn_layer_kernel, apply_relu=apply_relu,
                               x_resident=x_resident, tk=tk)
    return pl.pallas_call(
        kernel,
        out_shape=jax.ShapeDtypeStruct((n_p, h_p), out_dtype),
        grid_spec=pltpu.PrefetchScalarGridSpec(
            num_scalar_prefetch=0,
            grid=(n_p // tm, n_p // tk),                     # reduction axis last
            in_specs=[
                pl.BlockSpec((tm, tk), lambda i, k: (i, k)),   # A tile
                x_spec,                                        # X (resident/tiled)
                pl.BlockSpec((f_p, h_p), lambda i, k: (0, 0)),  # W (resident)
                pl.BlockSpec((1, h_p), lambda i, k: (0, 0)),    # bias (resident)
            ],
            out_specs=pl.BlockSpec((tm, h_p), lambda i, k: (i, 0)),
            scratch_shapes=[pltpu.VMEM((tm, f_p), jnp.float32)],  # f32 accumulator
        ),
        compiler_params=pltpu.CompilerParams(
            dimension_semantics=("parallel", "arbitrary"),
            vmem_limit_bytes=vmem_limit,
        ),
    )(a_bf16, x_bf16, w_bf16, b_f32)


def gcn_forward(a_norm, x, w1, b1, w2, b2, *, tm_max=1024, tk_max=2048):
    """Full GCN forward: out = A @ relu(A @ X @ W1 + b1) @ W2 + b2."""
    n = a_norm.shape[0]
    in_feats = x.shape[1]
    h1_feats = w1.shape[1]
    h2_feats = w2.shape[1]

    n_p = _round_up(n, LANE)       # tiles are clamped to divisors of n_p, so
    f_p = _round_up(in_feats, LANE)  # node padding never exceeds 128-alignment
    h1_p = _round_up(h1_feats, LANE)
    h2_p = _round_up(h2_feats, LANE)

    # Matmul-order decision on PADDED widths: the O(N^2) aggregation should run
    # at min(f_p, h_p).  Here f_p <= h1_p == h2_p, so aggregate-then-project
    # (as implemented) is already the narrow-width order.
    # TODO(synk): add a project-then-aggregate path for configs with f_p > h_p.

    pad2 = lambda m, r, c: jnp.pad(m, ((0, r - m.shape[0]), (0, c - m.shape[1])))

    # Zero-padding is exact: padded A rows/cols and padded feature cols
    # contribute nothing to the real (sliced) outputs, even with nonzero bias
    # (padded h1 rows are multiplied by zero A columns in layer 2).
    a_p = pad2(a_norm, n_p, n_p).astype(jnp.bfloat16)
    x_p = pad2(x, n_p, f_p).astype(jnp.bfloat16)
    w1_p = pad2(w1, f_p, h1_p).astype(jnp.bfloat16)
    w2_p = pad2(w2, h1_p, h2_p).astype(jnp.bfloat16)
    b1_p = jnp.pad(b1, (0, h1_p - h1_feats)).reshape(1, h1_p).astype(jnp.float32)
    b2_p = jnp.pad(b2, (0, h2_p - h2_feats)).reshape(1, h2_p).astype(jnp.float32)

    # Layer 1 emits bf16 directly from the kernel epilogue (halves the h1
    # writeback and removes the separate XLA convert before layer 2).
    h1 = gcn_layer(a_p, x_p, w1_p, b1_p, apply_relu=True,
                   out_dtype=jnp.bfloat16, tm_max=tm_max, tk_max=tk_max)
    h2 = gcn_layer(a_p, h1, w2_p, b2_p, apply_relu=False,
                   out_dtype=jnp.float32, tm_max=tm_max, tk_max=tk_max)
    return h2[:n, :h2_feats]


def build_norm_adjacency(src, dst, n):
    # A_hat[dst, src] counts edge multiplicity (matches DGL on multigraphs);
    # D_in^{-1/2} A_hat D_out^{-1/2} with degrees clamped to 1 (norm='both',
    # allow_zero_in_degree=True).
    adj = jnp.zeros((n, n), jnp.float32).at[dst, src].add(1.0)
    out_deg = jnp.clip(adj.sum(axis=0), 1.0, None)
    in_deg = jnp.clip(adj.sum(axis=1), 1.0, None)
    return (in_deg[:, None] ** -0.5) * adj * (out_deg[None, :] ** -0.5)


def glorot(key, shape):
    fan_in, fan_out = shape
    limit = (6.0 / (fan_in + fan_out)) ** 0.5
    return jax.random.uniform(key, shape, jnp.float32, -limit, limit)


if __name__ == "__main__":
    N, IN_FEATS, H_FEATS, N_EDGES = 16, 16, 32, 40

    key = jax.random.PRNGKey(0)
    k_src, k_dst, k_x, k_w1, k_w2 = jax.random.split(key, 5)

    # Deterministic synthetic graph
    src = jax.random.randint(k_src, (N_EDGES,), 0, N)
    dst = jax.random.randint(k_dst, (N_EDGES,), 0, N)
    a_norm = build_norm_adjacency(src, dst, N)

    # Deterministic parameters (DGL GraphConv: xavier-uniform weight, zero bias)
    x = jax.random.normal(k_x, (N, IN_FEATS), jnp.float32)
    w1 = glorot(k_w1, (IN_FEATS, H_FEATS))
    b1 = jnp.zeros((H_FEATS,), jnp.float32)
    w2 = glorot(k_w2, (H_FEATS, H_FEATS))
    b2 = jnp.zeros((H_FEATS,), jnp.float32)

    out = jax.block_until_ready(gcn_forward(a_norm, x, w1, b1, w2, b2))

    # Pure-JAX reference mimicking the kernel's bf16-operand / f32-accumulate
    # path (including the bf16 h1 handoff between the two layers).
    hi = jax.lax.Precision.HIGHEST
    bf = lambda m: m.astype(jnp.bfloat16).astype(jnp.float32)
    agg1 = jnp.dot(bf(a_norm), bf(x), precision=hi)
    h1 = jnp.maximum(jnp.dot(bf(agg1), bf(w1), precision=hi) + b1, 0.0)
    agg2 = jnp.dot(bf(a_norm), bf(h1), precision=hi)
    ref = jnp.dot(bf(agg2), bf(w2), precision=hi) + b2

    assert out.shape == (N, H_FEATS)
    assert jnp.allclose(out, ref, atol=1e-2, rtol=1e-2), \
        float(jnp.abs(out - ref).max())

    print("KERNEL_OK")
</pallas_src>

<mosaic_0001>
module attributes {stable_mosaic.version = 11 : i64} {
  func.func @gcn_layer_kernel(%arg0: i32, %arg1: i32, %arg2: memref<128x128xbf16, #tpu.memory_space<vmem>>, %arg3: memref<128x128xbf16, #tpu.memory_space<vmem>>, %arg4: memref<128x128xbf16, #tpu.memory_space<vmem>>, %arg5: memref<1x128xf32, #tpu.memory_space<vmem>>, %arg6: memref<128x128xbf16, #tpu.memory_space<vmem>>, %arg7: memref<128x128xf32, #tpu.memory_space<vmem>>) attributes {dimension_semantics = [#tpu.dimension_semantics<parallel>, #tpu.dimension_semantics<arbitrary>], iteration_bounds = array<i64: 1, 1>, scalar_prefetch = 0 : i64, scratch_operands = 1 : i64, tpu.core_type = #tpu.core_type<tc>, window_params = [{transform_indices = @transform_0, window_bounds = array<i64: 128, 128>}, {pipeline_mode = #tpu.pipeline_mode<synchronous>, transform_indices = @transform_1, window_bounds = array<i64: 128, 128>}, {pipeline_mode = #tpu.pipeline_mode<synchronous>, transform_indices = @transform_2, window_bounds = array<i64: 128, 128>}, {pipeline_mode = #tpu.pipeline_mode<synchronous>, transform_indices = @transform_3, window_bounds = array<i64: 1, 128>}, {transform_indices = @transform_4, window_bounds = array<i64: 128, 128>}]} {
    %c0_i32 = arith.constant 0 : i32
    %0 = arith.cmpi eq, %arg1, %c0_i32 : i32
    %1 = arith.extui %0 : i1 to i32
    %c0_i32_0 = arith.constant 0 : i32
    %2 = arith.cmpi ne, %1, %c0_i32_0 : i32
    scf.if %2 {
      %cst_9 = arith.constant 0.000000e+00 : f32
      %15 = vector.broadcast %cst_9 : f32 to vector<128x128xf32>
      %c0_10 = arith.constant 0 : index
      %c0_11 = arith.constant 0 : index
      %16 = vector.load %arg7[%c0_10, %c0_11] : memref<128x128xf32, #tpu.memory_space<vmem>>, vector<128x128xf32>
      tpu.vector_store %arg7[%c0_10, %c0_11], %15 {strides = array<i32>} : memref<128x128xf32, #tpu.memory_space<vmem>>, vector<128x128xf32>,
    } else {
    }
    %c128_i32 = arith.constant 128 : i32
    %3 = arith.muli %arg1, %c128_i32 : i32
    %4 = tpu.assume_multiple %3, 128 : i32
    %5 = arith.index_cast %4 : i32 to index
    %c0 = arith.constant 0 : index
    %6 = vector.load %arg3[%5, %c0] : memref<128x128xbf16, #tpu.memory_space<vmem>>, vector<128x128xbf16>
    %c0_1 = arith.constant 0 : index
    %c0_2 = arith.constant 0 : index
    %7 = vector.load %arg7[%c0_1, %c0_2] : memref<128x128xf32, #tpu.memory_space<vmem>>, vector<128x128xf32>
    %c0_3 = arith.constant 0 : index
    %c0_4 = arith.constant 0 : index
    %8 = vector.load %arg2[%c0_3, %c0_4] : memref<128x128xbf16, #tpu.memory_space<vmem>>, vector<128x128xbf16>
    %cst = arith.constant dense<0.000000e+00> : vector<128x128xf32>
    %9 = tpu.matmul %8, %6, %cst {dimension_numbers = #tpu.dot_dimension_numbers<[1], [0], [0], [1], [0, 0, 1, 1], [], []>} : vector<128x128xbf16>, vector<128x128xbf16>, vector<128x128xf32> -> vector<128x128xf32>
    %10 = arith.addf %7, %9 : vector<128x128xf32>
    %c0_5 = arith.constant 0 : index
    %c0_6 = arith.constant 0 : index
    %11 = vector.load %arg7[%c0_5, %c0_6] : memref<128x128xf32, #tpu.memory_space<vmem>>, vector<128x128xf32>
    tpu.vector_store %arg7[%c0_5, %c0_6], %10 {strides = array<i32>} : memref<128x128xf32, #tpu.memory_space<vmem>>, vector<128x128xf32>,
    %c0_i32_7 = arith.constant 0 : i32
    %12 = arith.cmpi eq, %arg1, %c0_i32_7 : i32
    %13 = arith.extui %12 : i1 to i32
    %c0_i32_8 = arith.constant 0 : i32
    %14 = arith.cmpi ne, %13, %c0_i32_8 : i32
    scf.if %14 {
      %c0_9 = arith.constant 0 : index
      %c0_10 = arith.constant 0 : index
      %15 = vector.load %arg7[%c0_9, %c0_10] : memref<128x128xf32, #tpu.memory_space<vmem>>, vector<128x128xf32>
      %16 = arith.truncf %15 : vector<128x128xf32> to vector<128x128xbf16>
      %c0_11 = arith.constant 0 : index
      %c0_12 = arith.constant 0 : index
      %17 = vector.load %arg4[%c0_11, %c0_12] : memref<128x128xbf16, #tpu.memory_space<vmem>>, vector<128x128xbf16>
      %cst_13 = arith.constant dense<0.000000e+00> : vector<128x128xf32>
      %18 = tpu.matmul %16, %17, %cst_13 {dimension_numbers = #tpu.dot_dimension_numbers<[1], [0], [0], [1], [0, 0, 1, 1], [], []>} : vector<128x128xbf16>, vector<128x128xbf16>, vector<128x128xf32> -> vector<128x128xf32>
      %c0_14 = arith.constant 0 : index
      %c0_15 = arith.constant 0 : index
      %19 = vector.load %arg5[%c0_14, %c0_15] : memref<1x128xf32, #tpu.memory_space<vmem>>, vector<1x128xf32>
      %20 = vector.broadcast %19 : vector<1x128xf32> to vector<128x128xf32>
      %21 = arith.addf %18, %20 : vector<128x128xf32>
      %cst_16 = arith.constant 0.000000e+00 : f32
      %22 = vector.broadcast %cst_16 : f32 to vector<128x128xf32>
      %23 = arith.maximumf %21, %22 : vector<128x128xf32>
      %24 = arith.truncf %23 : vector<128x128xf32> to vector<128x128xbf16>
      %c0_17 = arith.constant 0 : index
      %c0_18 = arith.constant 0 : index
      %25 = vector.load %arg6[%c0_17, %c0_18] : memref<128x128xbf16, #tpu.memory_space<vmem>>, vector<128x128xbf16>
      tpu.vector_store %arg6[%c0_17, %c0_18], %24 {strides = array<i32>} : memref<128x128xbf16, #tpu.memory_space<vmem>>, vector<128x128xbf16>,
    } else {
    }
    return
  }
  func.func @transform_0(%arg0: i32, %arg1: i32) -> (i32, i32) {
    %c0_i32 = arith.constant 0 : i32
    return %arg0, %arg1 : i32, i32
  }
  func.func @transform_1(%arg0: i32, %arg1: i32) -> (i32, i32) {
    %c0_i32 = arith.constant 0 : i32
    %c0_i32_0 = arith.constant 0 : i32
    %c0_i32_1 = arith.constant 0 : i32
    return %c0_i32, %c0_i32_0 : i32, i32
  }
  func.func @transform_2(%arg0: i32, %arg1: i32) -> (i32, i32) {
    %c0_i32 = arith.constant 0 : i32
    %c0_i32_0 = arith.constant 0 : i32
    %c0_i32_1 = arith.constant 0 : i32
    return %c0_i32, %c0_i32_0 : i32, i32
  }
  func.func @transform_3(%arg0: i32, %arg1: i32) -> (i32, i32) {
    %c0_i32 = arith.constant 0 : i32
    %c0_i32_0 = arith.constant 0 : i32
    %c0_i32_1 = arith.constant 0 : i32
    return %c0_i32, %c0_i32_0 : i32, i32
  }
  func.func @transform_4(%arg0: i32, %arg1: i32) -> (i32, i32) {
    %c0_i32 = arith.constant 0 : i32
    %c0_i32_0 = arith.constant 0 : i32
    return %arg0, %c0_i32 : i32, i32
  }
}

</mosaic_0001>

<llo_original>
// kernel: tpu_custom_call.1
$region0: #{tpu_custom_call.1}
  #allocation0 [shape = 'u32[]', space=smem, size = 0x4, offset = 0x4, fixed_abs, tag = 'smem constant byte address 0x4 - core index']
  #allocation1 [shape = 'u32[144,128]{1,0:T(1,128)}', space=vmem, size = 0x12000, scoped, tag = 'internal scratch']
  #allocation2 [shape = 'f32[128,128]{1,0:T(8,128)}', space=vmem, size = 0x10000, scoped, tag = 'scratch operand']
  %s0 = inlined_call_operand.hbm [shape: bf16[128,128], index: 0, kind: input, shape index: {}]
  %s1 = inlined_call_operand.hbm [shape: bf16[128,128], index: 1, kind: input, shape index: {}]
  %s2 = inlined_call_operand.hbm [shape: bf16[128,128], index: 2, kind: input, shape index: {}]
  %s3 = inlined_call_operand.vmem [shape: f32[1,128], index: 3, kind: input, shape index: {}]
  %s4 = inlined_call_operand.hbm [shape: bf16[128,128], index: 4, kind: output, shape index: {}]
  %s5 = sld [smem:[#allocation0]]
  $region46: #{tpu_custom_call.1} parent=0
    _
  %s7 = ssub.s32 1, %s5
  %s8 = scalar_select 0, %s7, %s5
  $region1: #{tpu_custom_call.1} parent=0
    #allocation3 [shape = 'u8[32768]{0}', space=vmem, size = 0x8000, scoped, tag = 'input window, operand 0, single buffered']
    #allocation4 [shape = 's32[1]{0}', space=sflag, size = 0x4, scoped, tag = 'scoped memory for tpu_custom_call.1']
    #allocation5 [shape = 's32[1]{0}', space=sflag, size = 0x4, scoped, tag = 'scoped memory for tpu_custom_call.1']
    #allocation6 [shape = 'u8[32768]{0}', space=vmem, size = 0x8000, scoped, tag = 'input window, operand 1, single buffered']
    #allocation7 [shape = 's32[1]{0}', space=sflag, size = 0x4, scoped, tag = 'scoped memory for tpu_custom_call.1']
    #allocation8 [shape = 'u8[32768]{0}', space=vmem, size = 0x8000, scoped, tag = 'input window, operand 2, single buffered']
    #allocation9 [shape = 'u8[32768]{0}', space=vmem, size = 0x8000, scoped, tag = 'output window, operand 0, single buffered']
    %9 = vsyncpa [#allocation4], 0
    %10 = vsyncpa [#allocation7], 0
    %11 = vsyncpa [#allocation5], 0
    // Predicated region
    $region2: #{tpu_custom_call.1} parent=1 // pred_check
      _
    $region3: #{tpu_custom_call.1} parent=1 // pred_check_branch
      %13 = sbr.rel (0) target = $region5
    $region4: #{tpu_custom_call.1} parent=1 // pred_region
      %s15 = ssub.s32 1024, 1024
      %16 = vsyncadd [#allocation4], %s15
      %s17 = sshll.u32 [#allocation3], 4
      %s18 = int_to_ptr.vmem [resolvable:$true] %s17
      %23 = dma.hbm_to_vmem [thread:$0]  %s0, 1024, %s18, [#allocation4], 64, 64, 4
    $region5: #{tpu_custom_call.1} parent=1 // pred_fallthru
      _
    // Predicated region
    $region6: #{tpu_custom_call.1} parent=1 // pred_check
      _
    $region7: #{tpu_custom_call.1} parent=1 // pred_check_branch
      %25 = sbr.rel (0) target = $region9
    $region8: #{tpu_custom_call.1} parent=1 // pred_region
      %s27 = ssub.s32 1024, 1024
      %28 = vsyncadd [#allocation7], %s27
      %s29 = sshll.u32 [#allocation6], 4
      %s30 = int_to_ptr.vmem [resolvable:$true] %s29
      %35 = dma.hbm_to_vmem [thread:$0]  %s1, 1024, %s30, [#allocation7], 64, 64, 4
    $region9: #{tpu_custom_call.1} parent=1 // pred_fallthru
      _
    // Predicated region
    $region10: #{tpu_custom_call.1} parent=1 // pred_check
      _
    $region11: #{tpu_custom_call.1} parent=1 // pred_check_branch
      %37 = sbr.rel (0) target = $region13
    $region12: #{tpu_custom_call.1} parent=1 // pred_region
      %s39 = ssub.s32 1024, 1024
      %40 = vsyncadd [#allocation7], %s39
      %s41 = sshll.u32 [#allocation8], 4
      %s42 = int_to_ptr.vmem [resolvable:$true] %s41
      %47 = dma.hbm_to_vmem [thread:$0]  %s2, 1024, %s42, [#allocation7], 64, 64, 4
    $region13: #{tpu_custom_call.1} parent=1 // pred_fallthru
      _
    // Predicated region
    $region14: #{tpu_custom_call.1} parent=1 // pred_check
      _
    $region15: #{tpu_custom_call.1} parent=1 // pred_check_branch
      %49 = sbr.rel (0) target = $region17
    $region16: #{tpu_custom_call.1} parent=1 // pred_region
      _
    $region17: #{tpu_custom_call.1} parent=1 // pred_fallthru
      _
    // Predicated region
    $region18: #{tpu_custom_call.1} parent=1 // pred_check
      _
    $region19: #{tpu_custom_call.1} parent=1 // pred_check_branch
      %51 = sbr.rel (0) target = $region21
    $region20: #{tpu_custom_call.1} parent=1 // pred_region
      %52 = dma.done [#allocation4], 1024
    $region21: #{tpu_custom_call.1} parent=1 // pred_fallthru
      _
    // Predicated region
    $region22: #{tpu_custom_call.1} parent=1 // pred_check
      _
    $region23: #{tpu_custom_call.1} parent=1 // pred_check_branch
      %54 = sbr.rel (0) target = $region25
    $region24: #{tpu_custom_call.1} parent=1 // pred_region
      %55 = dma.done [#allocation7], 1024
    $region25: #{tpu_custom_call.1} parent=1 // pred_fallthru
      _
    // Predicated region
    $region26: #{tpu_custom_call.1} parent=1 // pred_check
      _
    $region27: #{tpu_custom_call.1} parent=1 // pred_check_branch
      %57 = sbr.rel (0) target = $region29
    $region28: #{tpu_custom_call.1} parent=1 // pred_region
      %58 = dma.done [#allocation7], 1024
    $region29: #{tpu_custom_call.1} parent=1 // pred_fallthru
      _
    %p60 = scmp.eq.s32.totalorder 0, 0
    // Predicated region
    $region30: #{tpu_custom_call.1} parent=1 // pred_check
      %p61 = pneg %p60
    $region31: #{tpu_custom_call.1} parent=1 // pred_check_branch
      %63 = sbr.rel (%p61) target = $region33
    $region32: #{tpu_custom_call.1} parent=1 // pred_region
      %64 = vst [vmem:[#allocation2] sm:$0xff] 0.0
      %65 = vst [vmem:[#allocation2 + $0x8] sm:$0xff] 0.0
      %66 = vst [vmem:[#allocation2 + $0x10] sm:$0xff] 0.0
      %67 = vst [vmem:[#allocation2 + $0x18] sm:$0xff] 0.0
      %68 = vst [vmem:[#allocation2 + $0x20] sm:$0xff] 0.0
      %69 = vst [vmem:[#allocation2 + $0x28] sm:$0xff] 0.0
      %70 = vst [vmem:[#allocation2 + $0x30] sm:$0xff] 0.0
      %71 = vst [vmem:[#allocation2 + $0x38] sm:$0xff] 0.0
      %72 = vst [vmem:[#allocation2 + $0x40] sm:$0xff] 0.0
      %73 = vst [vmem:[#allocation2 + $0x48] sm:$0xff] 0.0
      %74 = vst [vmem:[#allocation2 + $0x50] sm:$0xff] 0.0
      %75 = vst [vmem:[#allocation2 + $0x58] sm:$0xff] 0.0
      %76 = vst [vmem:[#allocation2 + $0x60] sm:$0xff] 0.0
      %77 = vst [vmem:[#allocation2 + $0x68] sm:$0xff] 0.0
      %78 = vst [vmem:[#allocation2 + $0x70] sm:$0xff] 0.0
      %79 = vst [vmem:[#allocation2 + $0x78] sm:$0xff] 0.0
    $region33: #{tpu_custom_call.1} parent=1 // pred_fallthru
      _
    %s80 = smul.u32 0, 128
    %s81 = sshra.s32 %s80, 3
    %s82 = sand.u32 %s80, 7
    %s83 = smul.addr %s81, 4
    %s84 = scalar_lea.vmem [#allocation6], %s83
    %v85 = vld [vmem:[%s84] sm:$0xf]
    %v86 = vld [vmem:[%s84 + $0x4] sm:$0xf]
    %v87 = vld [vmem:[%s84 + $0x8] sm:$0xf]
    %v88 = vld [vmem:[%s84 + $0xc] sm:$0xf]
    %v89 = vld [vmem:[%s84 + $0x10] sm:$0xf]
    %v90 = vld [vmem:[%s84 + $0x14] sm:$0xf]
    %v91 = vld [vmem:[%s84 + $0x18] sm:$0xf]
    %v92 = vld [vmem:[%s84 + $0x1c] sm:$0xf]
    %v93 = vld [vmem:[%s84 + $0x20] sm:$0xf]
    %v94 = vld [vmem:[%s84 + $0x24] sm:$0xf]
    %v95 = vld [vmem:[%s84 + $0x28] sm:$0xf]
    %v96 = vld [vmem:[%s84 + $0x2c] sm:$0xf]
    %v97 = vld [vmem:[%s84 + $0x30] sm:$0xf]
    %v98 = vld [vmem:[%s84 + $0x34] sm:$0xf]
    %v99 = vld [vmem:[%s84 + $0x38] sm:$0xf]
    %v100 = vld [vmem:[%s84 + $0x3c] sm:$0xf]
    %v101 = vld [vmem:[#allocation2] sm:$0xff]
    %v102 = vld [vmem:[#allocation2 + $0x8] sm:$0xff]
    %v103 = vld [vmem:[#allocation2 + $0x10] sm:$0xff]
    %v104 = vld [vmem:[#allocation2 + $0x18] sm:$0xff]
    %v105 = vld [vmem:[#allocation2 + $0x20] sm:$0xff]
    %v106 = vld [vmem:[#allocation2 + $0x28] sm:$0xff]
    %v107 = vld [vmem:[#allocation2 + $0x30] sm:$0xff]
    %v108 = vld [vmem:[#allocation2 + $0x38] sm:$0xff]
    %v109 = vld [vmem:[#allocation2 + $0x40] sm:$0xff]
    %v110 = vld [vmem:[#allocation2 + $0x48] sm:$0xff]
    %v111 = vld [vmem:[#allocation2 + $0x50] sm:$0xff]
    %v112 = vld [vmem:[#allocation2 + $0x58] sm:$0xff]
    %v113 = vld [vmem:[#allocation2 + $0x60] sm:$0xff]
    %v114 = vld [vmem:[#allocation2 + $0x68] sm:$0xff]
    %v115 = vld [vmem:[#allocation2 + $0x70] sm:$0xff]
    %v116 = vld [vmem:[#allocation2 + $0x78] sm:$0xff]
    %v117 = vld [vmem:[#allocation3] sm:$0xf]
    %v118 = vld [vmem:[#allocation3 + $0x4] sm:$0xf]
    %v119 = vld [vmem:[#allocation3 + $0x8] sm:$0xf]
    %v120 = vld [vmem:[#allocation3 + $0xc] sm:$0xf]
    %v121 = vld [vmem:[#allocation3 + $0x10] sm:$0xf]
    %v122 = vld [vmem:[#allocation3 + $0x14] sm:$0xf]
    %v123 = vld [vmem:[#allocation3 + $0x18] sm:$0xf]
    %v124 = vld [vmem:[#allocation3 + $0x1c] sm:$0xf]
    %v125 = vld [vmem:[#allocation3 + $0x20] sm:$0xf]
    %v126 = vld [vmem:[#allocation3 + $0x24] sm:$0xf]
    %v127 = vld [vmem:[#allocation3 + $0x28] sm:$0xf]
    %v128 = vld [vmem:[#allocation3 + $0x2c] sm:$0xf]
    %v129 = vld [vmem:[#allocation3 + $0x30] sm:$0xf]
    %v130 = vld [vmem:[#allocation3 + $0x34] sm:$0xf]
    %v131 = vld [vmem:[#allocation3 + $0x38] sm:$0xf]
    %v132 = vld [vmem:[#allocation3 + $0x3c] sm:$0xf]
    %v149 = vunpack.c.l.b16 %v117
    %v150 = vunpack.c.l.b16 %v118
    %v151 = vunpack.c.l.b16 %v119
    %v152 = vunpack.c.l.b16 %v120
    %v153 = vunpack.c.l.b16 %v121
    %v154 = vunpack.c.l.b16 %v122
    %v155 = vunpack.c.l.b16 %v123
    %v156 = vunpack.c.l.b16 %v124
    %v157 = vunpack.c.l.b16 %v125
    %v158 = vunpack.c.l.b16 %v126
    %v159 = vunpack.c.l.b16 %v127
    %v160 = vunpack.c.l.b16 %v128
    %v161 = vunpack.c.l.b16 %v129
    %v162 = vunpack.c.l.b16 %v130
    %v163 = vunpack.c.l.b16 %v131
    %v164 = vunpack.c.l.b16 %v132
    %v165 = vpack.c.b16 %v150, %v149
    %v166 = vpack.c.b16 %v152, %v151
    %v167 = vpack.c.b16 %v154, %v153
    %v168 = vpack.c.b16 %v156, %v155
    %v169 = vpack.c.b16 %v158, %v157
    %v170 = vpack.c.b16 %v160, %v159
    %v171 = vpack.c.b16 %v162, %v161
    %v172 = vpack.c.b16 %v164, %v163
    %v197 = vunpack.c.l.b16 %v85
    %v198 = vunpack.c.l.b16 %v86
    %v199 = vunpack.c.l.b16 %v87
    %v200 = vunpack.c.l.b16 %v88
    %v201 = vunpack.c.l.b16 %v89
    %v202 = vunpack.c.l.b16 %v90
    %v203 = vunpack.c.l.b16 %v91
    %v204 = vunpack.c.l.b16 %v92
    %v205 = vunpack.c.l.b16 %v93
    %v206 = vunpack.c.l.b16 %v94
    %v207 = vunpack.c.l.b16 %v95
    %v208 = vunpack.c.l.b16 %v96
    %v209 = vunpack.c.l.b16 %v97
    %v210 = vunpack.c.l.b16 %v98
    %v211 = vunpack.c.l.b16 %v99
    %v212 = vunpack.c.l.b16 %v100
    %v213 = vpack.c.b16 %v198, %v197
    %v214 = vpack.c.b16 %v200, %v199
    %v215 = vpack.c.b16 %v202, %v201
    %v216 = vpack.c.b16 %v204, %v203
    %v217 = vpack.c.b16 %v206, %v205
    %v218 = vpack.c.b16 %v208, %v207
    %v219 = vpack.c.b16 %v210, %v209
    %v220 = vpack.c.b16 %v212, %v211
    %229 = vmatprep.subr.bf16.mxu0 0
    %230 = vmatpush1.bf16.msra.mxu0 %v220
    %231 = vmatprep.subr.bf16.mxu0 0
    %232 = vmatpush1.bf16.msra.mxu0 %v219
    %233 = vmatprep.subr.bf16.mxu0 0
    %234 = vmatpush1.bf16.msra.mxu0 %v218
    %235 = vmatprep.subr.bf16.mxu0 0
    %236 = vmatpush1.bf16.msra.mxu0 %v217
    %237 = vmatprep.subr.bf16.mxu0 0
    %238 = vmatpush1.bf16.msra.mxu0 %v216
    %239 = vmatprep.subr.bf16.mxu0 0
    %240 = vmatpush1.bf16.msra.mxu0 %v215
    %241 = vmatprep.subr.bf16.mxu0 0
    %242 = vmatpush1.bf16.msra.mxu0 %v214
    %243 = vmatprep.subr.bf16.mxu0 0
    %244 = vmatpush1.bf16.msra.mxu0 %v213
    %245 = vmatprep.subr.bf16.mxu0 0
    %246 = vmatpush2.bf16.msra.mxu0 0
    %247 = vmatprep.subr.bf16.mxu0 0
    %248 = vmatpush2.bf16.msra.mxu0 0
    %249 = vmatprep.subr.bf16.mxu0 0
    %250 = vmatpush2.bf16.msra.mxu0 0
    %251 = vmatprep.subr.bf16.mxu0 0
    %252 = vmatpush2.bf16.msra.mxu0 0
    %253 = vmatprep.subr.bf16.mxu0 0
    %254 = vmatpush2.bf16.msra.mxu0 0
    %255 = vmatprep.subr.bf16.mxu0 0
    %256 = vmatpush2.bf16.msra.mxu0 0
    %257 = vmatprep.subr.bf16.mxu0 0
    %258 = vmatpush2.bf16.msra.mxu0 0
    %259 = vmatprep.subr.bf16.mxu0 0
    %260 = vmatpush2.bf16.msra.mxu0 0
    %261 = vmatprep.mubr.bf16.mxu0 0
    %262 = vmatmul.mubr.bf16.gmra.mxu0 %v165
    %v263 = vpop.f32.mrf.mxu0
    %v264 = vadd.f32 0.0, %v263
    %v265 = vpop.f32.mrf.mxu0
    %v266 = vpop.f32.mrf.mxu0
    %v267 = vadd.f32 0.0, %v266
    %v268 = vpop.f32.mrf.mxu0
    %269 = vmatprep.mubr.bf16.mxu0 0
    %270 = vmatmul.mubr.bf16.gmra.mxu0 %v166
    %v271 = vpop.f32.mrf.mxu0
    %v272 = vadd.f32 0.0, %v271
    %v273 = vpop.f32.mrf.mxu0
    %v274 = vpop.f32.mrf.mxu0
    %v275 = vadd.f32 0.0, %v274
    %v276 = vpop.f32.mrf.mxu0
    %277 = vmatprep.mubr.bf16.mxu0 0
    %278 = vmatmul.mubr.bf16.gmra.mxu0 %v167
    %v279 = vpop.f32.mrf.mxu0
    %v280 = vadd.f32 0.0, %v279
    %v281 = vpop.f32.mrf.mxu0
    %v282 = vpop.f32.mrf.mxu0
    %v283 = vadd.f32 0.0, %v282
    %v284 = vpop.f32.mrf.mxu0
    %285 = vmatprep.mubr.bf16.mxu0 0
    %286 = vmatmul.mubr.bf16.gmra.mxu0 %v168
    %v287 = vpop.f32.mrf.mxu0
    %v288 = vadd.f32 0.0, %v287
    %v289 = vpop.f32.mrf.mxu0
    %v290 = vpop.f32.mrf.mxu0
    %v291 = vadd.f32 0.0, %v290
    %v292 = vpop.f32.mrf.mxu0
    %293 = vmatprep.mubr.bf16.mxu0 0
    %294 = vmatmul.mubr.bf16.gmra.mxu0 %v169
    %v295 = vpop.f32.mrf.mxu0
    %v296 = vadd.f32 0.0, %v295
    %v297 = vpop.f32.mrf.mxu0
    %v298 = vpop.f32.mrf.mxu0
    %v299 = vadd.f32 0.0, %v298
    %v300 = vpop.f32.mrf.mxu0
    %301 = vmatprep.mubr.bf16.mxu0 0
    %302 = vmatmul.mubr.bf16.gmra.mxu0 %v170
    %v303 = vpop.f32.mrf.mxu0
    %v304 = vadd.f32 0.0, %v303
    %v305 = vpop.f32.mrf.mxu0
    %v306 = vpop.f32.mrf.mxu0
    %v307 = vadd.f32 0.0, %v306
    %v308 = vpop.f32.mrf.mxu0
    %309 = vmatprep.mubr.bf16.mxu0 0
    %310 = vmatmul.mubr.bf16.gmra.mxu0 %v171
    %v311 = vpop.f32.mrf.mxu0
    %v312 = vadd.f32 0.0, %v311
    %v313 = vpop.f32.mrf.mxu0
    %v314 = vpop.f32.mrf.mxu0
    %v315 = vadd.f32 0.0, %v314
    %v316 = vpop.f32.mrf.mxu0
    %317 = vmatprep.mubr.bf16.mxu0 0
    %318 = vmatmul.mubr.bf16.gmra.mxu0 %v172
    %v319 = vpop.f32.mrf.mxu0
    %v320 = vadd.f32 0.0, %v319
    %v321 = vpop.f32.mrf.mxu0
    %v322 = vpop.f32.mrf.mxu0
    %v323 = vadd.f32 0.0, %v322
    %v324 = vpop.f32.mrf.mxu0
    %325 = vdwg.mxu0
    %v326 = vadd.f32 %v101, %v264
    %v327 = vadd.f32 %v102, %v267
    %v328 = vadd.f32 %v103, %v272
    %v329 = vadd.f32 %v104, %v275
    %v330 = vadd.f32 %v105, %v280
    %v331 = vadd.f32 %v106, %v283
    %v332 = vadd.f32 %v107, %v288
    %v333 = vadd.f32 %v108, %v291
    %v334 = vadd.f32 %v109, %v296
    %v335 = vadd.f32 %v110, %v299
    %v336 = vadd.f32 %v111, %v304
    %v337 = vadd.f32 %v112, %v307
    %v338 = vadd.f32 %v113, %v312
    %v339 = vadd.f32 %v114, %v315
    %v340 = vadd.f32 %v115, %v320
    %v341 = vadd.f32 %v116, %v323
    %342 = vst [vmem:[#allocation2] sm:$0xff] %v326
    %343 = vst [vmem:[#allocation2 + $0x8] sm:$0xff] %v327
    %344 = vst [vmem:[#allocation2 + $0x10] sm:$0xff] %v328
    %345 = vst [vmem:[#allocation2 + $0x18] sm:$0xff] %v329
    %346 = vst [vmem:[#allocation2 + $0x20] sm:$0xff] %v330
    %347 = vst [vmem:[#allocation2 + $0x28] sm:$0xff] %v331
    %348 = vst [vmem:[#allocation2 + $0x30] sm:$0xff] %v332
    %349 = vst [vmem:[#allocation2 + $0x38] sm:$0xff] %v333
    %350 = vst [vmem:[#allocation2 + $0x40] sm:$0xff] %v334
    %351 = vst [vmem:[#allocation2 + $0x48] sm:$0xff] %v335
    %352 = vst [vmem:[#allocation2 + $0x50] sm:$0xff] %v336
    %353 = vst [vmem:[#allocation2 + $0x58] sm:$0xff] %v337
    %354 = vst [vmem:[#allocation2 + $0x60] sm:$0xff] %v338
    %355 = vst [vmem:[#allocation2 + $0x68] sm:$0xff] %v339
    %356 = vst [vmem:[#allocation2 + $0x70] sm:$0xff] %v340
    %357 = vst [vmem:[#allocation2 + $0x78] sm:$0xff] %v341
    // Predicated region
    $region34: #{tpu_custom_call.1} parent=1 // pred_check
      %p358 = pneg %p60
    $region35: #{tpu_custom_call.1} parent=1 // pred_check_branch
      %360 = sbr.rel (%p358) target = $region37
    $region36: #{tpu_custom_call.1} parent=1 // pred_region
      %v361 = vld [vmem:[#allocation2] sm:$0xff]
      %v362 = vld [vmem:[#allocation2 + $0x8] sm:$0xff]
      %v363 = vld [vmem:[#allocation2 + $0x10] sm:$0xff]
      %v364 = vld [vmem:[#allocation2 + $0x18] sm:$0xff]
      %v365 = vld [vmem:[#allocation2 + $0x20] sm:$0xff]
      %v366 = vld [vmem:[#allocation2 + $0x28] sm:$0xff]
      %v367 = vld [vmem:[#allocation2 + $0x30] sm:$0xff]
      %v368 = vld [vmem:[#allocation2 + $0x38] sm:$0xff]
      %v369 = vld [vmem:[#allocation2 + $0x40] sm:$0xff]
      %v370 = vld [vmem:[#allocation2 + $0x48] sm:$0xff]
      %v371 = vld [vmem:[#allocation2 + $0x50] sm:$0xff]
      %v372 = vld [vmem:[#allocation2 + $0x58] sm:$0xff]
      %v373 = vld [vmem:[#allocation2 + $0x60] sm:$0xff]
      %v374 = vld [vmem:[#allocation2 + $0x68] sm:$0xff]
      %v375 = vld [vmem:[#allocation2 + $0x70] sm:$0xff]
      %v376 = vld [vmem:[#allocation2 + $0x78] sm:$0xff]
      %v377 = vpack.c.bf16 %v362, %v361
      %v378 = vpack.c.bf16 %v364, %v363
      %v379 = vpack.c.bf16 %v366, %v365
      %v380 = vpack.c.bf16 %v368, %v367
      %v381 = vpack.c.bf16 %v370, %v369
      %v382 = vpack.c.bf16 %v372, %v371
      %v383 = vpack.c.bf16 %v374, %v373
      %v384 = vpack.c.bf16 %v376, %v375
      %v385 = vld [vmem:[#allocation8] sm:$0xf]
      %v386 = vld [vmem:[#allocation8 + $0x4] sm:$0xf]
      %v387 = vld [vmem:[#allocation8 + $0x8] sm:$0xf]
      %v388 = vld [vmem:[#allocation8 + $0xc] sm:$0xf]
      %v389 = vld [vmem:[#allocation8 + $0x10] sm:$0xf]
      %v390 = vld [vmem:[#allocation8 + $0x14] sm:$0xf]
      %v391 = vld [vmem:[#allocation8 + $0x18] sm:$0xf]
      %v392 = vld [vmem:[#allocation8 + $0x1c] sm:$0xf]
      %v393 = vld [vmem:[#allocation8 + $0x20] sm:$0xf]
      %v394 = vld [vmem:[#allocation8 + $0x24] sm:$0xf]
      %v395 = vld [vmem:[#allocation8 + $0x28] sm:$0xf]
      %v396 = vld [vmem:[#allocation8 + $0x2c] sm:$0xf]
      %v397 = vld [vmem:[#allocation8 + $0x30] sm:$0xf]
      %v398 = vld [vmem:[#allocation8 + $0x34] sm:$0xf]
      %v399 = vld [vmem:[#allocation8 + $0x38] sm:$0xf]
      %v400 = vld [vmem:[#allocation8 + $0x3c] sm:$0xf]
      %v401 = vld [vmem:[%s3] sm:$0x1]
      %v403 = vlaneseq
      %v404 = vshrl.u32 %v403, 7
      %v405 = vsub.s32 0, %v404
      %v406 = vrot.slane %v401, %v405
      %v424 = vunpack.c.l.b16 %v385
      %v425 = vunpack.c.l.b16 %v386
      %v426 = vunpack.c.l.b16 %v387
      %v427 = vunpack.c.l.b16 %v388
      %v428 = vunpack.c.l.b16 %v389
      %v429 = vunpack.c.l.b16 %v390
      %v430 = vunpack.c.l.b16 %v391
      %v431 = vunpack.c.l.b16 %v392
      %v432 = vunpack.c.l.b16 %v393
      %v433 = vunpack.c.l.b16 %v394
      %v434 = vunpack.c.l.b16 %v395
      %v435 = vunpack.c.l.b16 %v396
      %v436 = vunpack.c.l.b16 %v397
      %v437 = vunpack.c.l.b16 %v398
      %v438 = vunpack.c.l.b16 %v399
      %v439 = vunpack.c.l.b16 %v400
      %v440 = vpack.c.b16 %v425, %v424
      %v441 = vpack.c.b16 %v427, %v426
      %v442 = vpack.c.b16 %v429, %v428
      %v443 = vpack.c.b16 %v431, %v430
      %v444 = vpack.c.b16 %v433, %v432
      %v445 = vpack.c.b16 %v435, %v434
      %v446 = vpack.c.b16 %v437, %v436
      %v447 = vpack.c.b16 %v439, %v438
      %456 = vmatprep.subr.bf16.mxu0 0
      %457 = vmatpush1.bf16.msra.mxu0 %v447
      %458 = vmatprep.subr.bf16.mxu0 0
      %459 = vmatpush1.bf16.msra.mxu0 %v446
      %460 = vmatprep.subr.bf16.mxu0 0
      %461 = vmatpush1.bf16.msra.mxu0 %v445
      %462 = vmatprep.subr.bf16.mxu0 0
      %463 = vmatpush1.bf16.msra.mxu0 %v444
      %464 = vmatprep.subr.bf16.mxu0 0
      %465 = vmatpush1.bf16.msra.mxu0 %v443
      %466 = vmatprep.subr.bf16.mxu0 0
      %467 = vmatpush1.bf16.msra.mxu0 %v442
      %468 = vmatprep.subr.bf16.mxu0 0
      %469 = vmatpush1.bf16.msra.mxu0 %v441
      %470 = vmatprep.subr.bf16.mxu0 0
      %471 = vmatpush1.bf16.msra.mxu0 %v440
      %472 = vmatprep.subr.bf16.mxu0 0
      %473 = vmatpush2.bf16.msra.mxu0 0
      %474 = vmatprep.subr.bf16.mxu0 0
      %475 = vmatpush2.bf16.msra.mxu0 0
      %476 = vmatprep.subr.bf16.mxu0 0
      %477 = vmatpush2.bf16.msra.mxu0 0
      %478 = vmatprep.subr.bf16.mxu0 0
      %479 = vmatpush2.bf16.msra.mxu0 0
      %480 = vmatprep.subr.bf16.mxu0 0
      %481 = vmatpush2.bf16.msra.mxu0 0
      %482 = vmatprep.subr.bf16.mxu0 0
      %483 = vmatpush2.bf16.msra.mxu0 0
      %484 = vmatprep.subr.bf16.mxu0 0
      %485 = vmatpush2.bf16.msra.mxu0 0
      %486 = vmatprep.subr.bf16.mxu0 0
      %487 = vmatpush2.bf16.msra.mxu0 0
      %488 = vmatprep.mubr.bf16.mxu0 0
      %489 = vmatmul.mubr.bf16.gmra.mxu0 %v377
      %v490 = vpop.f32.mrf.mxu0
      %v491 = vadd.f32 %v406, %v490
      %v492 = vpop.f32.mrf.mxu0
      %v493 = vpop.f32.mrf.mxu0
      %v494 = vadd.f32 %v406, %v493
      %v495 = vpop.f32.mrf.mxu0
      %496 = vmatprep.mubr.bf16.mxu0 0
      %497 = vmatmul.mubr.bf16.gmra.mxu0 %v378
      %v498 = vpop.f32.mrf.mxu0
      %v499 = vadd.f32 %v406, %v498
      %v500 = vpop.f32.mrf.mxu0
      %v501 = vpop.f32.mrf.mxu0
      %v502 = vadd.f32 %v406, %v501
      %v503 = vpop.f32.mrf.mxu0
      %504 = vmatprep.mubr.bf16.mxu0 0
      %505 = vmatmul.mubr.bf16.gmra.mxu0 %v379
      %v506 = vpop.f32.mrf.mxu0
      %v507 = vadd.f32 %v406, %v506
      %v508 = vpop.f32.mrf.mxu0
      %v509 = vpop.f32.mrf.mxu0
      %v510 = vadd.f32 %v406, %v509
      %v511 = vpop.f32.mrf.mxu0
      %512 = vmatprep.mubr.bf16.mxu0 0
      %513 = vmatmul.mubr.bf16.gmra.mxu0 %v380
      %v514 = vpop.f32.mrf.mxu0
      %v515 = vadd.f32 %v406, %v514
      %v516 = vpop.f32.mrf.mxu0
      %v517 = vpop.f32.mrf.mxu0
      %v518 = vadd.f32 %v406, %v517
      %v519 = vpop.f32.mrf.mxu0
      %520 = vmatprep.mubr.bf16.mxu0 0
      %521 = vmatmul.mubr.bf16.gmra.mxu0 %v381
      %v522 = vpop.f32.mrf.mxu0
      %v523 = vadd.f32 %v406, %v522
      %v524 = vpop.f32.mrf.mxu0
      %v525 = vpop.f32.mrf.mxu0
      %v526 = vadd.f32 %v406, %v525
      %v527 = vpop.f32.mrf.mxu0
      %528 = vmatprep.mubr.bf16.mxu0 0
      %529 = vmatmul.mubr.bf16.gmra.mxu0 %v382
      %v530 = vpop.f32.mrf.mxu0
      %v531 = vadd.f32 %v406, %v530
      %v532 = vpop.f32.mrf.mxu0
      %v533 = vpop.f32.mrf.mxu0
      %v534 = vadd.f32 %v406, %v533
      %v535 = vpop.f32.mrf.mxu0
      %536 = vmatprep.mubr.bf16.mxu0 0
      %537 = vmatmul.mubr.bf16.gmra.mxu0 %v383
      %v538 = vpop.f32.mrf.mxu0
      %v539 = vadd.f32 %v406, %v538
      %v540 = vpop.f32.mrf.mxu0
      %v541 = vpop.f32.mrf.mxu0
      %v542 = vadd.f32 %v406, %v541
      %v543 = vpop.f32.mrf.mxu0
      %544 = vmatprep.mubr.bf16.mxu0 0
      %545 = vmatmul.mubr.bf16.gmra.mxu0 %v384
      %v546 = vpop.f32.mrf.mxu0
      %v547 = vadd.f32 %v406, %v546
      %v548 = vpop.f32.mrf.mxu0
      %v549 = vpop.f32.mrf.mxu0
      %v550 = vadd.f32 %v406, %v549
      %v551 = vpop.f32.mrf.mxu0
      %552 = vdwg.mxu0
      %v553 = vmax.f32 %v491, 0.0
      %v554 = vmax.f32 %v494, 0.0
      %v555 = vmax.f32 %v499, 0.0
      %v556 = vmax.f32 %v502, 0.0
      %v557 = vmax.f32 %v507, 0.0
      %v558 = vmax.f32 %v510, 0.0
      %v559 = vmax.f32 %v515, 0.0
      %v560 = vmax.f32 %v518, 0.0
      %v561 = vmax.f32 %v523, 0.0
      %v562 = vmax.f32 %v526, 0.0
      %v563 = vmax.f32 %v531, 0.0
      %v564 = vmax.f32 %v534, 0.0
      %v565 = vmax.f32 %v539, 0.0
      %v566 = vmax.f32 %v542, 0.0
      %v567 = vmax.f32 %v547, 0.0
      %v568 = vmax.f32 %v550, 0.0
      %v569 = vpack.c.bf16 %v554, %v553
      %v570 = vpack.c.bf16 %v556, %v555
      %v571 = vpack.c.bf16 %v558, %v557
      %v572 = vpack.c.bf16 %v560, %v559
      %v573 = vpack.c.bf16 %v562, %v561
      %v574 = vpack.c.bf16 %v564, %v563
      %v575 = vpack.c.bf16 %v566, %v565
      %v576 = vpack.c.bf16 %v568, %v567
      %v585 = vunpack.c.l.b16 %v569
      %v586 = vunpack.c.h.b16 %v569
      %v587 = vunpack.c.l.b16 %v570
      %v588 = vunpack.c.h.b16 %v570
      %v589 = vunpack.c.l.b16 %v571
      %v590 = vunpack.c.h.b16 %v571
      %v591 = vunpack.c.l.b16 %v572
      %v592 = vunpack.c.h.b16 %v572
      %v593 = vunpack.c.l.b16 %v573
      %v594 = vunpack.c.h.b16 %v573
      %v595 = vunpack.c.l.b16 %v574
      %v596 = vunpack.c.h.b16 %v574
      %v597 = vunpack.c.l.b16 %v575
      %v598 = vunpack.c.h.b16 %v575
      %v599 = vunpack.c.l.b16 %v576
      %v600 = vunpack.c.h.b16 %v576
      %v601 = vpack.c.b16 %v585, %v585
      %v602 = vpack.c.b16 %v586, %v586
      %v603 = vpack.c.b16 %v587, %v587
      %v604 = vpack.c.b16 %v588, %v588
      %v605 = vpack.c.b16 %v589, %v589
      %v606 = vpack.c.b16 %v590, %v590
      %v607 = vpack.c.b16 %v591, %v591
      %v608 = vpack.c.b16 %v592, %v592
      %v609 = vpack.c.b16 %v593, %v593
      %v610 = vpack.c.b16 %v594, %v594
      %v611 = vpack.c.b16 %v595, %v595
      %v612 = vpack.c.b16 %v596, %v596
      %v613 = vpack.c.b16 %v597, %v597
      %v614 = vpack.c.b16 %v598, %v598
      %v615 = vpack.c.b16 %v599, %v599
      %v616 = vpack.c.b16 %v600, %v600
      %633 = vst [vmem:[#allocation9] sm:$0xf] %v601
      %634 = vst [vmem:[#allocation9 + $0x4] sm:$0xf] %v602
      %635 = vst [vmem:[#allocation9 + $0x8] sm:$0xf] %v603
      %636 = vst [vmem:[#allocation9 + $0xc] sm:$0xf] %v604
      %637 = vst [vmem:[#allocation9 + $0x10] sm:$0xf] %v605
      %638 = vst [vmem:[#allocation9 + $0x14] sm:$0xf] %v606
      %639 = vst [vmem:[#allocation9 + $0x18] sm:$0xf] %v607
      %640 = vst [vmem:[#allocation9 + $0x1c] sm:$0xf] %v608
      %641 = vst [vmem:[#allocation9 + $0x20] sm:$0xf] %v609
      %642 = vst [vmem:[#allocation9 + $0x24] sm:$0xf] %v610
      %643 = vst [vmem:[#allocation9 + $0x28] sm:$0xf] %v611
      %644 = vst [vmem:[#allocation9 + $0x2c] sm:$0xf] %v612
      %645 = vst [vmem:[#allocation9 + $0x30] sm:$0xf] %v613
      %646 = vst [vmem:[#allocation9 + $0x34] sm:$0xf] %v614
      %647 = vst [vmem:[#allocation9 + $0x38] sm:$0xf] %v615
      %648 = vst [vmem:[#allocation9 + $0x3c] sm:$0xf] %v616
    $region37: #{tpu_custom_call.1} parent=1 // pred_fallthru
      _
    // Predicated region
    $region38: #{tpu_custom_call.1} parent=1 // pred_check
      _
    $region39: #{tpu_custom_call.1} parent=1 // pred_check_branch
      %650 = sbr.rel (0) target = $region41
    $region40: #{tpu_custom_call.1} parent=1 // pred_region
      %s652 = ssub.s32 1024, 1024
      %653 = vsyncadd [#allocation5], %s652
      %s654 = sshll.u32 [#allocation9], 4
      %s655 = int_to_ptr.vmem [resolvable:$true] %s654
      %660 = dma.vmem_to_hbm [thread:$0]  %s655, 1024, %s4, [#allocation5], 64, 64, 4
    $region41: #{tpu_custom_call.1} parent=1 // pred_fallthru
      _
    // Predicated region
    $region42: #{tpu_custom_call.1} parent=1 // pred_check
      _
    $region43: #{tpu_custom_call.1} parent=1 // pred_check_branch
      %662 = sbr.rel (0) target = $region45
    $region44: #{tpu_custom_call.1} parent=1 // pred_region
      %663 = dma.done [#allocation5], 1024
    $region45: #{tpu_custom_call.1} parent=1 // pred_fallthru
      _
    %664 = vsyncpa [#allocation4], 1
    %665 = vsyncpa [#allocation7], 1
    %666 = vsyncpa [#allocation5], 1

</llo_original>
